<compile_context>
chip_gen: v5e
topology: v5e:2x2
jax: 0.10.0
libtpu: 0.0.40
codegen_flags: <defaults>
</compile_context>

<pallas_src>
import functools
import math

import jax
import jax.numpy as jnp
from jax.experimental import pallas as pl
from jax.experimental.pallas import tpu as pltpu


def _round_up(x, m):
    return ((x + m - 1) // m) * m


def _soft_dot_attention_kernel(*refs, has_mask, fused_h_gemm, compute_dtype):
    if has_mask:
        h_ref, ctx_ref, mask_ref, *w_refs, h_tilde_ref, attn_ref = refs
    else:
        h_ref, ctx_ref, *w_refs, h_tilde_ref, attn_ref = refs
        mask_ref = None

    D = h_ref.shape[-1]

    # Context stays in its native dtype in HBM; per-tile cast to f32 here.
    ctx = ctx_ref[...].astype(jnp.float32)                      # (TB, S, D)
    h_lhs = h_ref[...].astype(compute_dtype)                    # (TB, D)

    # h-side GEMMs (MXU, f32 accumulate):
    #   target = linear_in(h) = h @ w_in^T
    #   h_pre  = h @ w_out[:, D:]^T   (h-contribution to linear_out)
    if fused_h_gemm:
        w_h_ref, w_c_ref = w_refs
        hw = jnp.dot(h_lhs, w_h_ref[...],
                     preferred_element_type=jnp.float32)        # (TB, 2D) f32
        target = hw[:, :D]
        h_pre = hw[:, D:]
    else:
        w_in_t_ref, w_out_h_t_ref, w_c_ref = w_refs
        target = jnp.dot(h_lhs, w_in_t_ref[...],
                         preferred_element_type=jnp.float32)    # (TB, D) f32
        h_pre = jnp.dot(h_lhs, w_out_h_t_ref[...],
                        preferred_element_type=jnp.float32)     # (TB, D) f32

    # Attention scores: logits[b, s] = <context[b, s, :], target[b, :]>.
    # q=1 per batch row, so keep this off the MXU: VPU broadcast-mul + XLU
    # lane reduce (both units have slack in this mem-bound kernel).
    logits = jnp.sum(ctx * target[:, None, :], axis=-1)         # (TB, S) f32

    if has_mask:
        mask = mask_ref[...]                                     # (TB, S) 0/1 f32
        row_valid = jnp.sum(mask, axis=-1, keepdims=True) > 0.0  # (TB, 1) bool
        fill = jnp.logical_and(mask == 0.0, row_valid)
        logits = jnp.where(fill, jnp.float32(-1e30), logits)

    # Masked softmax in f32 (exact reciprocal -- EUP is not the bottleneck).
    m = jnp.max(logits, axis=-1, keepdims=True)
    e = jnp.exp(logits - m)
    attn = e / jnp.sum(e, axis=-1, keepdims=True)
    if has_mask:
        attn = attn * row_valid.astype(jnp.float32)
    attn_ref[...] = attn

    # weighted_context[b, d] = sum_s attn[b, s] * context[b, s, d]
    # VPU broadcast-mul + sublane reduce over S.
    wc = jnp.sum(attn[:, :, None] * ctx, axis=1)                 # (TB, D) f32

    # h_tilde = tanh(cat(wc, h) @ w_out^T)
    #         = tanh(wc @ w_out[:, :D]^T + h @ w_out[:, D:]^T)
    pre = jnp.dot(wc.astype(compute_dtype), w_c_ref[...],
                  preferred_element_type=jnp.float32) + h_pre    # (TB, D) f32
    h_tilde_ref[...] = jnp.tanh(pre)


def _choose_block_b(B, S, D, itemsize):
    """Batch tile: >= 2 grid steps when legal (DMA/compute overlap + v7x
    megacore sharding) while keeping the context tile within a budget that is
    safe on all generations (v7x: 64 MiB/TC physical VMEM)."""
    if B <= 16:
        return B
    bytes_per_row = S * D * itemsize
    rows_by_vmem = max(16, (6 * 1024 * 1024) // bytes_per_row)
    rows_by_steps = _round_up((B + 1) // 2, 16)      # at least 2 grid steps
    bb = min(int(rows_by_vmem), rows_by_steps, 256)
    bb = max(16, (bb // 16) * 16)                    # bf16 sublane packing
    return B if bb >= B else bb


def soft_dot_attention(h, context, w_in, w_out, mask=None, *,
                       block_b=None, compute_dtype=jnp.bfloat16):
    """Pallas implementation of SoftDotAttention.forward.

    Returns (h_tilde, attn) (float32) matching the PyTorch module.  Only the
    weight GEMM operands go through `compute_dtype` (default bf16, f32
    accumulation); pass compute_dtype=jnp.float32 for bit-closer results.
    """
    B, S, D = context.shape
    assert h.shape == (B, D)
    assert w_in.shape == (D, D)
    assert w_out.shape == (D, 2 * D)

    # ---- weight layout plumbing (weights are tiny next to context) ----------
    w_in_t = jnp.transpose(w_in)                       # (D, D)
    w_out_c_t = jnp.transpose(w_out[:, :D])            # (D, D)
    w_out_h_t = jnp.transpose(w_out[:, D:])            # (D, D)

    fused_h_gemm = (D % 128 == 0)                      # clean lane split of hw
    if fused_h_gemm:
        weight_args = [
            jnp.concatenate([w_in_t, w_out_h_t], axis=1).astype(compute_dtype),
            w_out_c_t.astype(compute_dtype),
        ]
        weight_specs = [
            pl.BlockSpec((D, 2 * D), lambda i: (0, 0)),
            pl.BlockSpec((D, D), lambda i: (0, 0)),
        ]
    else:
        weight_args = [
            w_in_t.astype(compute_dtype),
            w_out_h_t.astype(compute_dtype),
            w_out_c_t.astype(compute_dtype),
        ]
        weight_specs = [
            pl.BlockSpec((D, D), lambda i: (0, 0)),
            pl.BlockSpec((D, D), lambda i: (0, 0)),
            pl.BlockSpec((D, D), lambda i: (0, 0)),
        ]

    has_mask = mask is not None
    if has_mask:
        valid = (mask != 0).astype(jnp.float32)        # nonzero == valid

    # ---- batch tiling --------------------------------------------------------
    itemsize = jnp.dtype(context.dtype).itemsize
    if block_b is None:
        block_b = _choose_block_b(B, S, D, itemsize)
    else:
        block_b = min(block_b, B)
        if block_b < B:
            block_b = max(16, _round_up(block_b, 16))
            if block_b >= B:
                block_b = B

    Bp = _round_up(B, block_b)
    if Bp != B:
        h = jnp.pad(h, ((0, Bp - B), (0, 0)))
        context = jnp.pad(context, ((0, Bp - B), (0, 0), (0, 0)))
        if has_mask:
            valid = jnp.pad(valid, ((0, Bp - B), (0, 0)))

    # ---- specs / operands ----------------------------------------------------
    in_specs = [
        pl.BlockSpec((block_b, D), lambda i: (i, 0)),          # h
        pl.BlockSpec((block_b, S, D), lambda i: (i, 0, 0)),    # context (unpadded S)
    ]
    operands = [h, context]
    if has_mask:
        in_specs.append(pl.BlockSpec((block_b, S), lambda i: (i, 0)))
        operands.append(valid)
    in_specs.extend(weight_specs)
    operands.extend(weight_args)

    out_specs = (
        pl.BlockSpec((block_b, D), lambda i: (i, 0)),          # h_tilde
        pl.BlockSpec((block_b, S), lambda i: (i, 0)),          # attn
    )
    out_shape = (
        jax.ShapeDtypeStruct((Bp, D), jnp.float32),
        jax.ShapeDtypeStruct((Bp, S), jnp.float32),
    )

    # VMEM estimate for this tile (double-buffered inputs/outputs + f32
    # broadcast temporaries); keep the scoped limit below v7x physical VMEM.
    f32b = 4
    cdt_b = jnp.dtype(compute_dtype).itemsize
    ctx_tile_bytes = block_b * S * D * itemsize
    est_vmem = (2 * ctx_tile_bytes
                + 2 * block_b * S * D * f32b
                + 2 * 3 * D * D * cdt_b
                + 6 * block_b * (D + S) * f32b)
    vmem_limit = int(max(32 * 1024 * 1024,
                         min(56 * 1024 * 1024, (est_vmem * 3) // 2)))

    kernel = functools.partial(_soft_dot_attention_kernel,
                               has_mask=has_mask,
                               fused_h_gemm=fused_h_gemm,
                               compute_dtype=compute_dtype)

    h_tilde_p, attn_p = pl.pallas_call(
        kernel,
        out_shape=out_shape,
        grid=(Bp // block_b,),
        in_specs=in_specs,
        out_specs=out_specs,
        compiler_params=pltpu.CompilerParams(
            dimension_semantics=("parallel",),
            vmem_limit_bytes=vmem_limit,
        ),
    )(*operands)

    return h_tilde_p[:B], attn_p[:B]


def _reference(h, context, w_in, w_out, mask=None):
    """Pure-JAX reference matching the PyTorch forward pass."""
    target = h @ w_in.T
    attn = jnp.einsum('bsd,bd->bs', context, target)
    if mask is not None:
        valid = (mask != 0)
        row_valid = jnp.any(valid, axis=-1, keepdims=True)
        fill = jnp.logical_and(~valid, row_valid)
        attn = jnp.where(fill, -jnp.inf, attn)
        attn = jax.nn.softmax(attn, axis=-1)
        attn = attn * row_valid.astype(attn.dtype)
    else:
        attn = jax.nn.softmax(attn, axis=-1)
    wc = jnp.einsum('bs,bsd->bd', attn, context)
    h_tilde = jnp.tanh(jnp.concatenate([wc, h], axis=1) @ w_out.T)
    return h_tilde, attn


def init_params(dim, key):
    """Deterministic init mimicking nn.Linear default (uniform +/- 1/sqrt(fan_in))."""
    k_in, k_out = jax.random.split(key)
    b_in = 1.0 / math.sqrt(dim)
    b_out = 1.0 / math.sqrt(2 * dim)
    w_in = jax.random.uniform(k_in, (dim, dim), jnp.float32, -b_in, b_in)
    w_out = jax.random.uniform(k_out, (dim, 2 * dim), jnp.float32, -b_out, b_out)
    return w_in, w_out


if __name__ == "__main__":
    key = jax.random.PRNGKey(0)
    k_h, k_ctx, k_mask, k_params, k_h2, k_ctx2, k_mask2 = jax.random.split(key, 7)

    # Small single-tile case.
    B, S, D = 2, 8, 32
    h = jax.random.normal(k_h, (B, D), jnp.float32)
    context = jax.random.normal(k_ctx, (B, S, D), jnp.float32)
    w_in, w_out = init_params(D, k_params)
    mask = (jax.random.uniform(k_mask, (B, S)) > 0.3).astype(jnp.int32)

    for m in (None, mask):
        # Default bf16 compute path: shape / finiteness / softmax-sum checks
        # plus a loose comparison against the f32 reference.
        out_bf16 = soft_dot_attention(h, context, w_in, w_out, mask=m)
        jax.block_until_ready(out_bf16)
        ref = _reference(h, context, w_in, w_out, mask=m)
        assert out_bf16[0].shape == (B, D) and out_bf16[1].shape == (B, S)
        assert bool(jnp.all(jnp.isfinite(out_bf16[0])))
        assert bool(jnp.all(jnp.isfinite(out_bf16[1])))
        assert bool(jnp.max(jnp.abs(out_bf16[0] - ref[0])) < 0.2)
        assert bool(jnp.max(jnp.abs(out_bf16[1] - ref[1])) < 0.2)

        # f32 compute path: tight comparison against the reference.
        out_f32 = soft_dot_attention(h, context, w_in, w_out, mask=m,
                                     compute_dtype=jnp.float32)
        jax.block_until_ready(out_f32)
        assert bool(jnp.max(jnp.abs(out_f32[0] - ref[0])) < 2e-3)
        assert bool(jnp.max(jnp.abs(out_f32[1] - ref[1])) < 2e-3)

    # Softmax rows sum to 1 in the unmasked path (exact reciprocal).
    attn_nm = soft_dot_attention(h, context, w_in, w_out)[1]
    assert bool(jnp.all(jnp.abs(jnp.sum(attn_nm, axis=-1) - 1.0) < 1e-4))

    # Multi-step grid + batch-padding path (B not a multiple of block_b),
    # including an all-invalid mask row.
    B2, S2, D2 = 40, 8, 32
    h2 = jax.random.normal(k_h2, (B2, D2), jnp.float32)
    ctx2 = jax.random.normal(k_ctx2, (B2, S2, D2), jnp.float32)
    mask2 = (jax.random.uniform(k_mask2, (B2, S2)) > 0.3).astype(jnp.int32)
    mask2 = mask2.at[3].set(0)
    out2 = soft_dot_attention(h2, ctx2, w_in, w_out, mask=mask2,
                              block_b=16, compute_dtype=jnp.float32)
    jax.block_until_ready(out2)
    ref2 = _reference(h2, ctx2, w_in, w_out, mask=mask2)
    assert bool(jnp.all(jnp.isfinite(out2[0])))
    assert bool(jnp.all(jnp.isfinite(out2[1])))
    assert bool(jnp.max(jnp.abs(out2[0] - ref2[0])) < 2e-3)
    assert bool(jnp.max(jnp.abs(out2[1] - ref2[1])) < 2e-3)

    print("KERNEL_OK")
</pallas_src>

<mosaic_0001>
module attributes {stable_mosaic.version = 11 : i64} {
  func.func @_soft_dot_attention_kernel(%arg0: i32, %arg1: memref<2x32xf32, #tpu.memory_space<vmem>>, %arg2: memref<2x8x32xf32, #tpu.memory_space<vmem>>, %arg3: memref<32x32xbf16, #tpu.memory_space<vmem>>, %arg4: memref<32x32xbf16, #tpu.memory_space<vmem>>, %arg5: memref<32x32xbf16, #tpu.memory_space<vmem>>, %arg6: memref<2x32xf32, #tpu.memory_space<vmem>>, %arg7: memref<2x8xf32, #tpu.memory_space<vmem>>) attributes {dimension_semantics = [#tpu.dimension_semantics<parallel>], iteration_bounds = array<i64: 1>, scalar_prefetch = 0 : i64, scratch_operands = 0 : i64, tpu.core_type = #tpu.core_type<tc>, window_params = [{transform_indices = @transform_0, window_bounds = array<i64: 2, 32>}, {transform_indices = @transform_1, window_bounds = array<i64: 2, 8, 32>}, {pipeline_mode = #tpu.pipeline_mode<synchronous>, transform_indices = @transform_2, window_bounds = array<i64: 32, 32>}, {pipeline_mode = #tpu.pipeline_mode<synchronous>, transform_indices = @transform_3, window_bounds = array<i64: 32, 32>}, {pipeline_mode = #tpu.pipeline_mode<synchronous>, transform_indices = @transform_4, window_bounds = array<i64: 32, 32>}, {transform_indices = @transform_5, window_bounds = array<i64: 2, 32>}, {transform_indices = @transform_6, window_bounds = array<i64: 2, 8>}]} {
    %c0 = arith.constant 0 : index
    %c0_0 = arith.constant 0 : index
    %c0_1 = arith.constant 0 : index
    %0 = vector.load %arg2[%c0, %c0_0, %c0_1] : memref<2x8x32xf32, #tpu.memory_space<vmem>>, vector<2x8x32xf32>
    %c0_2 = arith.constant 0 : index
    %c0_3 = arith.constant 0 : index
    %1 = vector.load %arg1[%c0_2, %c0_3] : memref<2x32xf32, #tpu.memory_space<vmem>>, vector<2x32xf32>
    %2 = arith.truncf %1 : vector<2x32xf32> to vector<2x32xbf16>
    %c0_4 = arith.constant 0 : index
    %c0_5 = arith.constant 0 : index
    %3 = vector.load %arg3[%c0_4, %c0_5] : memref<32x32xbf16, #tpu.memory_space<vmem>>, vector<32x32xbf16>
    %cst = arith.constant dense<0.000000e+00> : vector<2x32xf32>
    %4 = tpu.matmul %2, %3, %cst {dimension_numbers = #tpu.dot_dimension_numbers<[1], [0], [0], [1], [0, 0, 1, 1], [], []>} : vector<2x32xbf16>, vector<32x32xbf16>, vector<2x32xf32> -> vector<2x32xf32>
    %c0_6 = arith.constant 0 : index
    %c0_7 = arith.constant 0 : index
    %5 = vector.load %arg4[%c0_6, %c0_7] : memref<32x32xbf16, #tpu.memory_space<vmem>>, vector<32x32xbf16>
    %cst_8 = arith.constant dense<0.000000e+00> : vector<2x32xf32>
    %6 = tpu.matmul %2, %5, %cst_8 {dimension_numbers = #tpu.dot_dimension_numbers<[1], [0], [0], [1], [0, 0, 1, 1], [], []>} : vector<2x32xbf16>, vector<32x32xbf16>, vector<2x32xf32> -> vector<2x32xf32>
    %7 = vector.shape_cast %4 : vector<2x32xf32> to vector<2x1x32xf32>
    %8 = vector.broadcast %7 : vector<2x1x32xf32> to vector<2x8x32xf32>
    %9 = arith.mulf %0, %8 : vector<2x8x32xf32>
    %cst_9 = arith.constant dense<0.000000e+00> : vector<2x8xf32>
    %10 = vector.multi_reduction <add>, %9, %cst_9 [2] : vector<2x8x32xf32> to vector<2x8xf32>
    %cst_10 = arith.constant dense<0xFF800000> : vector<2xf32>
    %11 = vector.multi_reduction <maximumf>, %10, %cst_10 [1] : vector<2x8xf32> to vector<2xf32>
    %12 = vector.shape_cast %11 : vector<2xf32> to vector<2x1xf32>
    %13 = vector.broadcast %12 : vector<2x1xf32> to vector<2x8xf32>
    %14 = arith.subf %10, %13 : vector<2x8xf32>
    %15 = math.exp %14 : vector<2x8xf32>
    %cst_11 = arith.constant dense<0.000000e+00> : vector<2xf32>
    %16 = vector.multi_reduction <add>, %15, %cst_11 [1] : vector<2x8xf32> to vector<2xf32>
    %17 = vector.shape_cast %16 : vector<2xf32> to vector<2x1xf32>
    %18 = vector.broadcast %17 : vector<2x1xf32> to vector<2x8xf32>
    %19 = arith.divf %15, %18 : vector<2x8xf32>
    %c0_12 = arith.constant 0 : index
    %c0_13 = arith.constant 0 : index
    %20 = vector.load %arg7[%c0_12, %c0_13] : memref<2x8xf32, #tpu.memory_space<vmem>>, vector<2x8xf32>
    tpu.vector_store %arg7[%c0_12, %c0_13], %19 {strides = array<i32>} : memref<2x8xf32, #tpu.memory_space<vmem>>, vector<2x8xf32>,
    %21 = vector.shape_cast %19 : vector<2x8xf32> to vector<2x8x1xf32>
    %22 = vector.broadcast %21 : vector<2x8x1xf32> to vector<2x8x32xf32>
    %23 = arith.mulf %22, %0 : vector<2x8x32xf32>
    %cst_14 = arith.constant dense<0.000000e+00> : vector<2x32xf32>
    %24 = vector.multi_reduction <add>, %23, %cst_14 [1] : vector<2x8x32xf32> to vector<2x32xf32>
    %25 = arith.truncf %24 : vector<2x32xf32> to vector<2x32xbf16>
    %c0_15 = arith.constant 0 : index
    %c0_16 = arith.constant 0 : index
    %26 = vector.load %arg5[%c0_15, %c0_16] : memref<32x32xbf16, #tpu.memory_space<vmem>>, vector<32x32xbf16>
    %cst_17 = arith.constant dense<0.000000e+00> : vector<2x32xf32>
    %27 = tpu.matmul %25, %26, %cst_17 {dimension_numbers = #tpu.dot_dimension_numbers<[1], [0], [0], [1], [0, 0, 1, 1], [], []>} : vector<2x32xbf16>, vector<32x32xbf16>, vector<2x32xf32> -> vector<2x32xf32>
    %28 = arith.addf %27, %6 : vector<2x32xf32>
    %29 = math.tanh %28 : vector<2x32xf32>
    %c0_18 = arith.constant 0 : index
    %c0_19 = arith.constant 0 : index
    %30 = vector.load %arg6[%c0_18, %c0_19] : memref<2x32xf32, #tpu.memory_space<vmem>>, vector<2x32xf32>
    tpu.vector_store %arg6[%c0_18, %c0_19], %29 {strides = array<i32>} : memref<2x32xf32, #tpu.memory_space<vmem>>, vector<2x32xf32>,
    return
  }
  func.func @transform_0(%arg0: i32) -> (i32, i32) {
    %c0_i32 = arith.constant 0 : i32
    %c0_i32_0 = arith.constant 0 : i32
    return %arg0, %c0_i32 : i32, i32
  }
  func.func @transform_1(%arg0: i32) -> (i32, i32, i32) {
    %c0_i32 = arith.constant 0 : i32
    %c0_i32_0 = arith.constant 0 : i32
    %c0_i32_1 = arith.constant 0 : i32
    return %arg0, %c0_i32, %c0_i32_0 : i32, i32, i32
  }
  func.func @transform_2(%arg0: i32) -> (i32, i32) {
    %c0_i32 = arith.constant 0 : i32
    %c0_i32_0 = arith.constant 0 : i32
    %c0_i32_1 = arith.constant 0 : i32
    return %c0_i32, %c0_i32_0 : i32, i32
  }
  func.func @transform_3(%arg0: i32) -> (i32, i32) {
    %c0_i32 = arith.constant 0 : i32
    %c0_i32_0 = arith.constant 0 : i32
    %c0_i32_1 = arith.constant 0 : i32
    return %c0_i32, %c0_i32_0 : i32, i32
  }
  func.func @transform_4(%arg0: i32) -> (i32, i32) {
    %c0_i32 = arith.constant 0 : i32
    %c0_i32_0 = arith.constant 0 : i32
    %c0_i32_1 = arith.constant 0 : i32
    return %c0_i32, %c0_i32_0 : i32, i32
  }
  func.func @transform_5(%arg0: i32) -> (i32, i32) {
    %c0_i32 = arith.constant 0 : i32
    %c0_i32_0 = arith.constant 0 : i32
    return %arg0, %c0_i32 : i32, i32
  }
  func.func @transform_6(%arg0: i32) -> (i32, i32) {
    %c0_i32 = arith.constant 0 : i32
    %c0_i32_0 = arith.constant 0 : i32
    return %arg0, %c0_i32 : i32, i32
  }
}

</mosaic_0001>

<llo_original>
// kernel: tpu_custom_call.1
$region0: #{tpu_custom_call.1}
  #allocation0 [shape = 'u32[]', space=smem, size = 0x4, offset = 0x4, fixed_abs, tag = 'smem constant byte address 0x4 - core index']
  #allocation1 [shape = 'u32[72,128]{1,0:T(1,128)}', space=vmem, size = 0x9000, scoped, tag = 'internal scratch']
  %s0 = inlined_call_operand.hbm [shape: f32[2,32], index: 0, kind: input, shape index: {}]
  %s1 = inlined_call_operand.hbm [shape: f32[2,8,32], index: 1, kind: input, shape index: {}]
  %s2 = inlined_call_operand.hbm [shape: bf16[32,32], index: 2, kind: input, shape index: {}]
  %s3 = inlined_call_operand.hbm [shape: bf16[32,32], index: 3, kind: input, shape index: {}]
  %s4 = inlined_call_operand.hbm [shape: bf16[32,32], index: 4, kind: input, shape index: {}]
  %s5 = inlined_call_operand.hbm [shape: f32[2,32], index: 5, kind: output, shape index: {0}]
  %s6 = inlined_call_operand.hbm [shape: f32[2,8], index: 6, kind: output, shape index: {1}]
  %7 = xla_tuple %s5, %s6
  %s8 = sld [smem:[#allocation0]]
  $region58: #{tpu_custom_call.1} parent=0
    _
  %s10 = ssub.s32 1, %s8
  %s11 = scalar_select 0, %s10, %s8
  $region1: #{tpu_custom_call.1} parent=0
    #allocation2 [shape = 'u8[1024]{0}', space=vmem, size = 0x400, scoped, tag = 'input window, operand 0, single buffered']
    #allocation3 [shape = 's32[1]{0}', space=sflag, size = 0x4, scoped, tag = 'scoped memory for tpu_custom_call.1']
    #allocation4 [shape = 's32[1]{0}', space=sflag, size = 0x4, scoped, tag = 'scoped memory for tpu_custom_call.1']
    #allocation5 [shape = 'u8[8192]{0}', space=vmem, size = 0x2000, scoped, tag = 'input window, operand 1, single buffered']
    #allocation6 [shape = 's32[1]{0}', space=sflag, size = 0x4, scoped, tag = 'scoped memory for tpu_custom_call.1']
    #allocation7 [shape = 'u8[8192]{0}', space=vmem, size = 0x2000, scoped, tag = 'input window, operand 2, single buffered']
    #allocation8 [shape = 'u8[8192]{0}', space=vmem, size = 0x2000, scoped, tag = 'input window, operand 3, single buffered']
    #allocation9 [shape = 's32[1]{0}', space=sflag, size = 0x4, scoped, tag = 'scoped memory for tpu_custom_call.1']
    #allocation10 [shape = 'u8[8192]{0}', space=vmem, size = 0x2000, scoped, tag = 'input window, operand 4, single buffered']
    #allocation11 [shape = 'u8[1024]{0}', space=vmem, size = 0x400, scoped, tag = 'output window, operand 0, single buffered']
    #allocation12 [shape = 'u8[1024]{0}', space=vmem, size = 0x400, scoped, tag = 'output window, operand 1, single buffered']
    #allocation13 [shape = 's32[1]{0}', space=sflag, size = 0x4, scoped, tag = 'scoped memory for tpu_custom_call.1']
    %12 = vsyncpa [#allocation3], 0
    %13 = vsyncpa [#allocation6], 0
    %14 = vsyncpa [#allocation9], 0
    %15 = vsyncpa [#allocation4], 0
    %16 = vsyncpa [#allocation13], 0
    // Predicated region
    $region2: #{tpu_custom_call.1} parent=1 // pred_check
      _
    $region3: #{tpu_custom_call.1} parent=1 // pred_check_branch
      %18 = sbr.rel (0) target = $region5
    $region4: #{tpu_custom_call.1} parent=1 // pred_region
      %20 = vsyncadd [#allocation3], 0
      %s22 = sshll.u32 %s0, 4
      %s23 = int_to_ptr.hbm [resolvable:$true] %s22
      %s24 = sshll.u32 [#allocation2], 4
      %s25 = int_to_ptr.vmem [resolvable:$true] %s24
      %27 = dma.hbm_to_vmem [thread:$0]  %s23, 32, %s25, [#allocation3]
    $region5: #{tpu_custom_call.1} parent=1 // pred_fallthru
      _
    // Predicated region
    $region6: #{tpu_custom_call.1} parent=1 // pred_check
      _
    $region7: #{tpu_custom_call.1} parent=1 // pred_check_branch
      %29 = sbr.rel (0) target = $region9
    $region8: #{tpu_custom_call.1} parent=1 // pred_region
      %31 = vsyncadd [#allocation6], 0
      %s32 = sshll.u32 %s1, 4
      %s33 = int_to_ptr.hbm [resolvable:$true] %s32
      %s34 = sshll.u32 [#allocation5], 4
      %s35 = int_to_ptr.vmem [resolvable:$true] %s34
      %40 = dma.hbm_to_vmem [thread:$0]  %s33, 256, %s35, [#allocation6], 128, 128, 8
    $region9: #{tpu_custom_call.1} parent=1 // pred_fallthru
      _
    // Predicated region
    $region10: #{tpu_custom_call.1} parent=1 // pred_check
      _
    $region11: #{tpu_custom_call.1} parent=1 // pred_check_branch
      %42 = sbr.rel (0) target = $region13
    $region12: #{tpu_custom_call.1} parent=1 // pred_region
      %44 = vsyncadd [#allocation6], 0
      %s45 = sshll.u32 %s2, 4
      %s46 = int_to_ptr.hbm [resolvable:$true] %s45
      %s47 = sshll.u32 [#allocation7], 4
      %s48 = int_to_ptr.vmem [resolvable:$true] %s47
      %53 = dma.hbm_to_vmem [thread:$0]  %s46, 256, %s48, [#allocation6], 64, 64, 4
    $region13: #{tpu_custom_call.1} parent=1 // pred_fallthru
      _
    // Predicated region
    $region14: #{tpu_custom_call.1} parent=1 // pred_check
      _
    $region15: #{tpu_custom_call.1} parent=1 // pred_check_branch
      %55 = sbr.rel (0) target = $region17
    $region16: #{tpu_custom_call.1} parent=1 // pred_region
      %57 = vsyncadd [#allocation9], 0
      %s58 = sshll.u32 %s3, 4
      %s59 = int_to_ptr.hbm [resolvable:$true] %s58
      %s60 = sshll.u32 [#allocation8], 4
      %s61 = int_to_ptr.vmem [resolvable:$true] %s60
      %66 = dma.hbm_to_vmem [thread:$0]  %s59, 256, %s61, [#allocation9], 64, 64, 4
    $region17: #{tpu_custom_call.1} parent=1 // pred_fallthru
      _
    // Predicated region
    $region18: #{tpu_custom_call.1} parent=1 // pred_check
      _
    $region19: #{tpu_custom_call.1} parent=1 // pred_check_branch
      %68 = sbr.rel (0) target = $region21
    $region20: #{tpu_custom_call.1} parent=1 // pred_region
      %70 = vsyncadd [#allocation9], 0
      %s71 = sshll.u32 %s4, 4
      %s72 = int_to_ptr.hbm [resolvable:$true] %s71
      %s73 = sshll.u32 [#allocation10], 4
      %s74 = int_to_ptr.vmem [resolvable:$true] %s73
      %79 = dma.hbm_to_vmem [thread:$0]  %s72, 256, %s74, [#allocation9], 64, 64, 4
    $region21: #{tpu_custom_call.1} parent=1 // pred_fallthru
      _
    // Predicated region
    $region22: #{tpu_custom_call.1} parent=1 // pred_check
      _
    $region23: #{tpu_custom_call.1} parent=1 // pred_check_branch
      %81 = sbr.rel (0) target = $region25
    $region24: #{tpu_custom_call.1} parent=1 // pred_region
      %83 = dma.done [#allocation3], 32
    $region25: #{tpu_custom_call.1} parent=1 // pred_fallthru
      _
    // Predicated region
    $region26: #{tpu_custom_call.1} parent=1 // pred_check
      _
    $region27: #{tpu_custom_call.1} parent=1 // pred_check_branch
      %85 = sbr.rel (0) target = $region29
    $region28: #{tpu_custom_call.1} parent=1 // pred_region
      %87 = dma.done [#allocation6], 256
    $region29: #{tpu_custom_call.1} parent=1 // pred_fallthru
      _
    // Predicated region
    $region30: #{tpu_custom_call.1} parent=1 // pred_check
      _
    $region31: #{tpu_custom_call.1} parent=1 // pred_check_branch
      %89 = sbr.rel (0) target = $region33
    $region32: #{tpu_custom_call.1} parent=1 // pred_region
      %91 = dma.done [#allocation6], 256
    $region33: #{tpu_custom_call.1} parent=1 // pred_fallthru
      _
    // Predicated region
    $region34: #{tpu_custom_call.1} parent=1 // pred_check
      _
    $region35: #{tpu_custom_call.1} parent=1 // pred_check_branch
      %93 = sbr.rel (0) target = $region37
    $region36: #{tpu_custom_call.1} parent=1 // pred_region
      %95 = dma.done [#allocation9], 256
    $region37: #{tpu_custom_call.1} parent=1 // pred_fallthru
      _
    // Predicated region
    $region38: #{tpu_custom_call.1} parent=1 // pred_check
      _
    $region39: #{tpu_custom_call.1} parent=1 // pred_check_branch
      %97 = sbr.rel (0) target = $region41
    $region40: #{tpu_custom_call.1} parent=1 // pred_region
      %99 = dma.done [#allocation9], 256
    $region41: #{tpu_custom_call.1} parent=1 // pred_fallthru
      _
    %v101 = vld [vmem:[#allocation5] sm:$0xff]
    %v102 = vld [vmem:[#allocation5 + $0x8] sm:$0xff]
    %v103 = vld [vmem:[#allocation2] sm:$0x3]
    %v104 = vpack.c.bf16 %v103, %v103
    %v105 = vld [vmem:[#allocation7] sm:$0xf]
    %v106 = vld [vmem:[#allocation7 + $0x4] sm:$0xf]
    %v107 = vld [vmem:[#allocation7 + $0x8] sm:$0xf]
    %v108 = vld [vmem:[#allocation7 + $0xc] sm:$0xf]
    %v113 = vunpack.c.l.b16 %v105
    %v114 = vunpack.c.l.b16 %v106
    %v115 = vunpack.c.l.b16 %v107
    %v116 = vunpack.c.l.b16 %v108
    %v117 = vpack.c.b16 %v114, %v113
    %v118 = vpack.c.b16 %v116, %v115
    %vm121 = vcmask 261120
    %v123 = vsel %vm121, %v104, 0
    %125 = vmatpush.bf16.msra.mxu0 0
    %126 = vmatpush.bf16.msra.mxu0 0
    %127 = vmatpush.bf16.msra.mxu0 0
    %128 = vmatpush.bf16.msra.mxu0 0
    %129 = vmatpush.bf16.msra.mxu0 0
    %130 = vmatpush.bf16.msra.mxu0 0
    %131 = vmatpush.bf16.msra.mxu0 %v118
    %132 = vmatpush.bf16.msra.mxu0 %v117
    %133 = vmatmul.bf16.gmra.mxu0 %v123
    %v134 = vpop.f32.mrf.mxu0
    %v135 = vadd.f32 0.0, %v134
    %v136 = vpop.f32.mrf.mxu0
    %137 = vdwg.mxu0
    %v138 = vld [vmem:[#allocation8] sm:$0xf]
    %v139 = vld [vmem:[#allocation8 + $0x4] sm:$0xf]
    %v140 = vld [vmem:[#allocation8 + $0x8] sm:$0xf]
    %v141 = vld [vmem:[#allocation8 + $0xc] sm:$0xf]
    %v146 = vunpack.c.l.b16 %v138
    %v147 = vunpack.c.l.b16 %v139
    %v148 = vunpack.c.l.b16 %v140
    %v149 = vunpack.c.l.b16 %v141
    %v150 = vpack.c.b16 %v147, %v146
    %v151 = vpack.c.b16 %v149, %v148
    %154 = vmatpush.bf16.msra.mxu0 0
    %155 = vmatpush.bf16.msra.mxu0 0
    %156 = vmatpush.bf16.msra.mxu0 0
    %157 = vmatpush.bf16.msra.mxu0 0
    %158 = vmatpush.bf16.msra.mxu0 0
    %159 = vmatpush.bf16.msra.mxu0 0
    %160 = vmatpush.bf16.msra.mxu0 %v151
    %161 = vmatpush.bf16.msra.mxu0 %v150
    %162 = vmatmul.bf16.gmra.mxu0 %v123
    %v163 = vpop.f32.mrf.mxu0
    %v164 = vadd.f32 0.0, %v163
    %v165 = vpop.f32.mrf.mxu0
    %166 = vdwg.mxu0
    %v168 = vrot.slane %v135, 1
    %v169 = vperm.slane %v135, 0
    %v170 = vperm.slane %v168, 0
    %v173 = vmul.f32 %v101, %v169
    %v174 = vmul.f32 %v102, %v170
    %v175 = vsel %vm121, %v173, 0.0
    %176 = vadd.xlane.f32.xlu0 %v175
    %v177 = vpop.xlane.xlu0 %176
    %v178 = vsel %vm121, %v174, 0.0
    %179 = vadd.xlane.f32.xlu0 %v178
    %v180 = vpop.xlane.xlu0 %179
    %v183 = vlaneseq
    %v184 = vand.u32 %v183, 127
    %v185 = vperm.slane %v177, %v184
    %v186 = vperm.slane %v180, %v184
    %vm187 = vcmask 1041409
    %v188 = vsel %vm187, %v186, %v185
    %vm190 = vcmask 58368
    %v191 = vsel %vm190, %v188, -inf
    %192 = vmax.xlane.f32.xlu0 %v191
    %v193 = vpop.xlane.xlu0 %192
    %v195 = vperm.slane %v193, 0
    %v196 = vperm.slane %v193, 1
    %v199 = vsub.f32 %v177, %v195
    %v200 = vsub.f32 %v180, %v196
    %v201 = vmul.f32 %v199, 1.442695
    %v202 = vpow.pop %v201
    %v203 = vmul.f32 %v200, 1.442695
    %v204 = vpow.pop %v203
    %207 = vset.pattern.permute.xlu0 0
    %208 = vperm.xlu0 %207, %v202
    %v209 = vpop.permute.xlu0 %208
    %210 = vset.pattern.permute.xlu0 0
    %211 = vperm.xlu0 %210, %v204
    %v212 = vpop.permute.xlu0 %211
    %v213 = vperm.slane %v209, %v184
    %v214 = vperm.slane %v212, %v184
    %v215 = vsel %vm187, %v214, %v213
    %v217 = vsel %vm190, %v215, 0.0
    %218 = vadd.xlane.f32.xlu0 %v217
    %v219 = vpop.xlane.xlu0 %218
    %v221 = vperm.slane %v219, 0
    %v222 = vperm.slane %v219, 1
    %v225 = vrcp.pop %v221
    %v226 = vmul.f32 %v221, %v225
    %v227 = vsub.f32 1.0, %v226
    %v228 = vmul.f32 %v225, %v227
    %v229 = vadd.f32 %v225, %v228
    %vm230 = vweird.f32 %v221
    %vm231 = vweird.f32 %v225
    %vm232 = vmor %vm230, %vm231
    %v233 = vsel %vm232, %v225, %v229
    %v234 = vand.u32 2147483647, %v221
    %vm235 = vcmp.eq.f32.partialorder %v234, 8.507059e+37
    %v236 = vand.u32 %v221, 2147483648
    %v237 = vor.u32 1.1754944e-38, %v236
    %v238 = vsel %vm235, %v237, %v233
    %v239 = vmul.f32 %v202, %v238
    %v240 = vrcp.pop %v222
    %v241 = vmul.f32 %v222, %v240
    %v242 = vsub.f32 1.0, %v241
    %v243 = vmul.f32 %v240, %v242
    %v244 = vadd.f32 %v240, %v243
    %vm245 = vweird.f32 %v222
    %vm246 = vweird.f32 %v240
    %vm247 = vmor %vm245, %vm246
    %v248 = vsel %vm247, %v240, %v244
    %v249 = vand.u32 2147483647, %v222
    %vm250 = vcmp.eq.f32.partialorder %v249, 8.507059e+37
    %v251 = vand.u32 %v222, 2147483648
    %v252 = vor.u32 1.1754944e-38, %v251
    %v253 = vsel %vm250, %v252, %v248
    %v254 = vmul.f32 %v204, %v253
    %257 = vset.pattern.permute.xlu0 0
    %258 = vperm.xlu0 %257, %v239
    %v259 = vpop.permute.xlu0 %258
    %260 = vset.pattern.permute.xlu0 0
    %261 = vperm.xlu0 %260, %v254
    %v262 = vpop.permute.xlu0 %261
    %v263 = vperm.slane %v259, %v184
    %v264 = vperm.slane %v262, %v184
    %v265 = vsel %vm187, %v264, %v263
    %267 = vst.msk [vmem:[#allocation12] sm:$0x3] %vm190, %v265
    %v270 = vmul.f32 %v259, %v101
    %v271 = vmul.f32 %v262, %v102
    %v272 = vsel %vm121, %v270, 0.0
    %v273 = vrot.slane %v272, 4
    %v274 = vadd.f32 %v272, %v273
    %v275 = vrot.slane %v274, 2
    %v276 = vadd.f32 %v274, %v275
    %v277 = vrot.slane %v276, 1
    %v278 = vadd.f32 %v276, %v277
    %v279 = vsel %vm121, %v271, 0.0
    %v280 = vrot.slane %v279, 4
    %v281 = vadd.f32 %v279, %v280
    %v282 = vrot.slane %v281, 2
    %v283 = vadd.f32 %v281, %v282
    %v284 = vrot.slane %v283, 1
    %v285 = vadd.f32 %v283, %v284
    %v286 = vpack.c.bf16 %v278, %v278
    %v287 = vpack.c.bf16 %v285, %v285
    %v288 = vld [vmem:[#allocation10] sm:$0xf]
    %v289 = vld [vmem:[#allocation10 + $0x4] sm:$0xf]
    %v290 = vld [vmem:[#allocation10 + $0x8] sm:$0xf]
    %v291 = vld [vmem:[#allocation10 + $0xc] sm:$0xf]
    %v294 = vunpack.c.l.b16 %v286
    %v295 = vunpack.c.l.b16 %v287
    %v296 = vsel %vm187, %v295, %v294
    %v297 = vpack.c.b16 %v296, %v296
    %v302 = vunpack.c.l.b16 %v288
    %v303 = vunpack.c.l.b16 %v289
    %v304 = vunpack.c.l.b16 %v290
    %v305 = vunpack.c.l.b16 %v291
    %v306 = vpack.c.b16 %v303, %v302
    %v307 = vpack.c.b16 %v305, %v304
    %v311 = vsel %vm121, %v297, 0
    %313 = vmatpush.bf16.msra.mxu0 0
    %314 = vmatpush.bf16.msra.mxu0 0
    %315 = vmatpush.bf16.msra.mxu0 0
    %316 = vmatpush.bf16.msra.mxu0 0
    %317 = vmatpush.bf16.msra.mxu0 0
    %318 = vmatpush.bf16.msra.mxu0 0
    %319 = vmatpush.bf16.msra.mxu0 %v307
    %320 = vmatpush.bf16.msra.mxu0 %v306
    %321 = vmatmul.bf16.gmra.mxu0 %v311
    %v322 = vpop.f32.mrf.mxu0
    %v323 = vadd.f32 %v164, %v322
    %v324 = vpop.f32.mrf.mxu0
    %325 = vdwg.mxu0
    %v326 = vtanh.pop %v323
    %vm327 = vcmask 254976
    %328 = vst.msk [vmem:[#allocation11] sm:$0x3] %vm327, %v326
    // Predicated region
    $region42: #{tpu_custom_call.1} parent=1 // pred_check
      _
    $region43: #{tpu_custom_call.1} parent=1 // pred_check_branch
      %330 = sbr.rel (0) target = $region45
    $region44: #{tpu_custom_call.1} parent=1 // pred_region
      %332 = vsyncadd [#allocation4], 0
      %s334 = sshll.u32 [#allocation11], 4
      %s335 = int_to_ptr.vmem [resolvable:$true] %s334
      %s336 = sshll.u32 %s5, 4
      %s337 = int_to_ptr.hbm [resolvable:$true] %s336
      %339 = dma.vmem_to_hbm [thread:$0]  %s335, 32, %s337, [#allocation4]
    $region45: #{tpu_custom_call.1} parent=1 // pred_fallthru
      _
    // Predicated region
    $region46: #{tpu_custom_call.1} parent=1 // pred_check
      _
    $region47: #{tpu_custom_call.1} parent=1 // pred_check_branch
      %341 = sbr.rel (0) target = $region49
    $region48: #{tpu_custom_call.1} parent=1 // pred_region
      %343 = vsyncadd [#allocation13], 0
      %s345 = sshll.u32 [#allocation12], 4
      %s346 = int_to_ptr.vmem [resolvable:$true] %s345
      %s347 = sshll.u32 %s6, 4
      %s348 = int_to_ptr.hbm [resolvable:$true] %s347
      %350 = dma.vmem_to_hbm [thread:$0]  %s346, 32, %s348, [#allocation13]
    $region49: #{tpu_custom_call.1} parent=1 // pred_fallthru
      _
    // Predicated region
    $region50: #{tpu_custom_call.1} parent=1 // pred_check
      _
    $region51: #{tpu_custom_call.1} parent=1 // pred_check_branch
      %352 = sbr.rel (0) target = $region53
    $region52: #{tpu_custom_call.1} parent=1 // pred_region
      %354 = dma.done [#allocation4], 32
    $region53: #{tpu_custom_call.1} parent=1 // pred_fallthru
      _
    // Predicated region
    $region54: #{tpu_custom_call.1} parent=1 // pred_check
      _
    $region55: #{tpu_custom_call.1} parent=1 // pred_check_branch
      %356 = sbr.rel (0) target = $region57
    $region56: #{tpu_custom_call.1} parent=1 // pred_region
      %358 = dma.done [#allocation13], 32
    $region57: #{tpu_custom_call.1} parent=1 // pred_fallthru
      _
    %359 = vsyncpa [#allocation3], 1
    %360 = vsyncpa [#allocation6], 1
    %361 = vsyncpa [#allocation9], 1
    %362 = vsyncpa [#allocation4], 1
    %363 = vsyncpa [#allocation13], 1

</llo_original>
